<compile_context>
chip_gen: v7x
topology: tpu7x:2x2x1
jax: 0.10.0
libtpu: 0.0.40
codegen_flags: <defaults>
</compile_context>

<pallas_src>
import jax
import jax.numpy as jnp
import numpy as np
from jax import lax
from jax.experimental import pallas as pl
from jax.experimental.pallas import tpu as pltpu

BN_EPS = 1e-5  # nn.BatchNorm2d default


def _fcn_head_kernel(xT_ref, w1t_ref, b1_ref, w2t_ref, b2_ref, o_ref):
    # xT_ref:  (1, 9*C_in, HW)   im2col'd input, contraction axis leading
    # w1t_ref: (C_inter, 9*C_in) BN-folded 3x3 conv weights
    # b1_ref:  (C_inter, 1)      BN-folded bias
    # w2t_ref: (C_out, C_inter)  1x1 conv weights
    # b2_ref:  (C_out, 1)        1x1 conv bias
    # o_ref:   (1, C_out, HW)
    xT = xT_ref[0]                                              # (9*C_in, HW)

    # 3x3 conv + folded BN + ReLU: one K=9*C_in MXU contraction, transposed so
    # the intermediate is lane-dense (C_inter on sublanes, HW on lanes).
    hT = jnp.dot(w1t_ref[...], xT, preferred_element_type=jnp.float32)
    hT = jnp.maximum(hT + b1_ref[...], 0.0)                     # (C_inter, HW)
    # Dropout(0.1): identity in eval mode.

    # 1x1 conv consumes hT directly as a dense RHS; lane-dense (C_out, HW) store.
    yT = jnp.dot(w2t_ref[...], hT, preferred_element_type=jnp.float32)
    o_ref[0] = jax.nn.sigmoid(yT + b2_ref[...])


def fcn_head_pallas(x_nchw, params):
    """x_nchw: (N, C_in, H, W) float32. Returns (N, C_out, H, W) float32."""
    N, C_in, H, W = x_nchw.shape
    C_inter = params["w1"].shape[0]
    C_out = params["w2"].shape[0]
    HW = H * W
    K9 = 9 * C_in

    # ---- host-side weight prep: fold eval-mode BN into conv1, lane-dense layout ----
    scale = params["bn_g"] / jnp.sqrt(params["bn_var"] + BN_EPS)        # (C_inter,)
    w1_f = params["w1"] * scale[:, None, None, None]                    # (O, I, 3, 3)
    b1 = (params["bn_b"] - params["bn_mean"] * scale).reshape(C_inter, 1)
    # (O, I, ky, kx) -> (O, ky, kx, I) -> (O, 9*C_in): tap-major, channel-minor,
    # matching the im2col layout below.
    w1t = jnp.transpose(w1_f, (0, 2, 3, 1)).reshape(C_inter, K9)
    w2t = params["w2"][:, :, 0, 0]                                      # (C_out, C_inter)
    b2 = params["b2"].reshape(C_out, 1)

    # ---- host-side im2col (transposed): kernel sees only matmul-ready operands ----
    x_nhwc = jnp.transpose(x_nchw, (0, 2, 3, 1))                        # (N, H, W, C_in)
    x_pad = jnp.pad(x_nhwc, ((0, 0), (1, 1), (1, 1), (0, 0)))           # conv padding=1
    taps = [x_pad[:, dy:dy + H, dx:dx + W, :]
            for dy in range(3) for dx in range(3)]                      # 9 x (N,H,W,C_in)
    x_col = jnp.stack(taps, axis=3).reshape(N, HW, K9)                  # (N, HW, 9*C_in)
    x_colT = jnp.transpose(x_col, (0, 2, 1))                            # (N, 9*C_in, HW)

    out = pl.pallas_call(
        _fcn_head_kernel,
        out_shape=jax.ShapeDtypeStruct((N, C_out, HW), jnp.float32),
        grid=(N,),
        in_specs=[
            pl.BlockSpec((1, K9, HW), lambda n: (n, 0, 0)),
            pl.BlockSpec((C_inter, K9), lambda n: (0, 0)),
            pl.BlockSpec((C_inter, 1), lambda n: (0, 0)),
            pl.BlockSpec((C_out, C_inter), lambda n: (0, 0)),
            pl.BlockSpec((C_out, 1), lambda n: (0, 0)),
        ],
        out_specs=pl.BlockSpec((1, C_out, HW), lambda n: (n, 0, 0)),
        compiler_params=pltpu.CompilerParams(dimension_semantics=("parallel",)),
    )(x_colT, w1t, b1, w2t, b2)

    # flattened NCHW -> (N, C_out, H, W)
    return out.reshape(N, C_out, H, W)


def fcn_head_ref(x, p):
    """Pure-JAX reference mirroring the PyTorch forward (eval mode)."""
    y = lax.conv_general_dilated(x, p["w1"], (1, 1), ((1, 1), (1, 1)),
                                 dimension_numbers=("NCHW", "OIHW", "NCHW"))
    scale = p["bn_g"] / jnp.sqrt(p["bn_var"] + BN_EPS)
    shift = p["bn_b"] - p["bn_mean"] * scale
    y = y * scale[None, :, None, None] + shift[None, :, None, None]
    y = jnp.maximum(y, 0.0)
    # Dropout(0.1): identity in eval mode.
    y = lax.conv_general_dilated(y, p["w2"], (1, 1), ((0, 0), (0, 0)),
                                 dimension_numbers=("NCHW", "OIHW", "NCHW"))
    y = y + p["b2"][None, :, None, None]
    return jax.nn.sigmoid(y)


if __name__ == "__main__":
    N, C_in, H, W = 2, 32, 16, 16
    C_inter = C_in // 4          # 8
    C_out = 4

    key = jax.random.PRNGKey(0)
    ks = jax.random.split(key, 8)
    sc = 0.1
    params = {
        "w1": sc * jax.random.normal(ks[0], (C_inter, C_in, 3, 3), jnp.float32),
        "bn_g": 1.0 + sc * jax.random.normal(ks[1], (C_inter,), jnp.float32),
        "bn_b": sc * jax.random.normal(ks[2], (C_inter,), jnp.float32),
        "bn_mean": sc * jax.random.normal(ks[3], (C_inter,), jnp.float32),
        "bn_var": jnp.abs(1.0 + sc * jax.random.normal(ks[4], (C_inter,), jnp.float32)),
        "w2": sc * jax.random.normal(ks[5], (C_out, C_inter, 1, 1), jnp.float32),
        "b2": sc * jax.random.normal(ks[6], (C_out,), jnp.float32),
    }
    x = jax.random.normal(ks[7], (N, C_in, H, W), jnp.float32)

    fcn = jax.jit(fcn_head_pallas)
    out = jax.block_until_ready(fcn(x, params))
    ref = fcn_head_ref(x, params)
    np.testing.assert_allclose(np.asarray(out), np.asarray(ref), atol=1e-4, rtol=1e-4)
    print("KERNEL_OK")
</pallas_src>

<mosaic_0001>
module attributes {stable_mosaic.version = 11 : i64} {
  func.func @_fcn_head_kernel(%arg0: i32, %arg1: memref<1x288x256xf32, #tpu.memory_space<vmem>>, %arg2: memref<8x288xf32, #tpu.memory_space<vmem>>, %arg3: memref<8x1xf32, #tpu.memory_space<vmem>>, %arg4: memref<4x8xf32, #tpu.memory_space<vmem>>, %arg5: memref<4x1xf32, #tpu.memory_space<vmem>>, %arg6: memref<1x4x256xf32, #tpu.memory_space<vmem>>) attributes {dimension_semantics = [#tpu.dimension_semantics<parallel>], iteration_bounds = array<i64: 2>, scalar_prefetch = 0 : i64, scratch_operands = 0 : i64, tpu.core_type = #tpu.core_type<tc>, window_params = [{transform_indices = @transform_0, window_bounds = array<i64: 1, 288, 256>}, {pipeline_mode = #tpu.pipeline_mode<synchronous>, transform_indices = @transform_1, window_bounds = array<i64: 8, 288>}, {pipeline_mode = #tpu.pipeline_mode<synchronous>, transform_indices = @transform_2, window_bounds = array<i64: 8, 1>}, {pipeline_mode = #tpu.pipeline_mode<synchronous>, transform_indices = @transform_3, window_bounds = array<i64: 4, 8>}, {pipeline_mode = #tpu.pipeline_mode<synchronous>, transform_indices = @transform_4, window_bounds = array<i64: 4, 1>}, {transform_indices = @transform_5, window_bounds = array<i64: 1, 4, 256>}]} {
    %c0 = arith.constant 0 : index
    %c0_0 = arith.constant 0 : index
    %c0_1 = arith.constant 0 : index
    %0 = vector.load %arg1[%c0, %c0_0, %c0_1] : memref<1x288x256xf32, #tpu.memory_space<vmem>>, vector<1x288x256xf32>
    %1 = vector.shape_cast %0 : vector<1x288x256xf32> to vector<288x256xf32>
    %c0_2 = arith.constant 0 : index
    %c0_3 = arith.constant 0 : index
    %2 = vector.load %arg2[%c0_2, %c0_3] : memref<8x288xf32, #tpu.memory_space<vmem>>, vector<8x288xf32>
    %cst = arith.constant dense<0.000000e+00> : vector<8x256xf32>
    %3 = tpu.matmul %2, %1, %cst {dimension_numbers = #tpu.dot_dimension_numbers<[1], [0], [0], [1], [0, 0, 1, 1], [], []>} : vector<8x288xf32>, vector<288x256xf32>, vector<8x256xf32> -> vector<8x256xf32>
    %c0_4 = arith.constant 0 : index
    %c0_5 = arith.constant 0 : index
    %4 = vector.load %arg3[%c0_4, %c0_5] : memref<8x1xf32, #tpu.memory_space<vmem>>, vector<8x1xf32>
    %5 = vector.broadcast %4 : vector<8x1xf32> to vector<8x256xf32>
    %6 = arith.addf %3, %5 : vector<8x256xf32>
    %cst_6 = arith.constant 0.000000e+00 : f32
    %7 = vector.broadcast %cst_6 : f32 to vector<8x256xf32>
    %8 = arith.maximumf %6, %7 : vector<8x256xf32>
    %c0_7 = arith.constant 0 : index
    %c0_8 = arith.constant 0 : index
    %9 = vector.load %arg4[%c0_7, %c0_8] : memref<4x8xf32, #tpu.memory_space<vmem>>, vector<4x8xf32>
    %cst_9 = arith.constant dense<0.000000e+00> : vector<4x256xf32>
    %10 = tpu.matmul %9, %8, %cst_9 {dimension_numbers = #tpu.dot_dimension_numbers<[1], [0], [0], [1], [0, 0, 1, 1], [], []>} : vector<4x8xf32>, vector<8x256xf32>, vector<4x256xf32> -> vector<4x256xf32>
    %c0_10 = arith.constant 0 : index
    %c0_11 = arith.constant 0 : index
    %11 = vector.load %arg5[%c0_10, %c0_11] : memref<4x1xf32, #tpu.memory_space<vmem>>, vector<4x1xf32>
    %12 = vector.broadcast %11 : vector<4x1xf32> to vector<4x256xf32>
    %13 = arith.addf %10, %12 : vector<4x256xf32>
    %14 = arith.negf %13 : vector<4x256xf32>
    %15 = math.exp %14 : vector<4x256xf32>
    %cst_12 = arith.constant 1.000000e+00 : f32
    %16 = vector.broadcast %cst_12 : f32 to vector<4x256xf32>
    %17 = arith.addf %16, %15 : vector<4x256xf32>
    %18 = arith.divf %16, %17 : vector<4x256xf32>
    %c0_13 = arith.constant 0 : index
    %c0_14 = arith.constant 0 : index
    %c0_15 = arith.constant 0 : index
    %19 = vector.load %arg6[%c0_13, %c0_14, %c0_15] : memref<1x4x256xf32, #tpu.memory_space<vmem>>, vector<1x4x256xf32>
    %20 = vector.shape_cast %19 : vector<1x4x256xf32> to vector<4x256xf32>
    %21 = vector.shape_cast %18 : vector<4x256xf32> to vector<1x4x256xf32>
    tpu.vector_store %arg6[%c0_13, %c0_14, %c0_15], %21 {strides = array<i32>} : memref<1x4x256xf32, #tpu.memory_space<vmem>>, vector<1x4x256xf32>,
    return
  }
  func.func @transform_0(%arg0: i32) -> (i32, i32, i32) {
    %c0_i32 = arith.constant 0 : i32
    %c0_i32_0 = arith.constant 0 : i32
    %c0_i32_1 = arith.constant 0 : i32
    return %arg0, %c0_i32, %c0_i32_0 : i32, i32, i32
  }
  func.func @transform_1(%arg0: i32) -> (i32, i32) {
    %c0_i32 = arith.constant 0 : i32
    %c0_i32_0 = arith.constant 0 : i32
    %c0_i32_1 = arith.constant 0 : i32
    return %c0_i32, %c0_i32_0 : i32, i32
  }
  func.func @transform_2(%arg0: i32) -> (i32, i32) {
    %c0_i32 = arith.constant 0 : i32
    %c0_i32_0 = arith.constant 0 : i32
    %c0_i32_1 = arith.constant 0 : i32
    return %c0_i32, %c0_i32_0 : i32, i32
  }
  func.func @transform_3(%arg0: i32) -> (i32, i32) {
    %c0_i32 = arith.constant 0 : i32
    %c0_i32_0 = arith.constant 0 : i32
    %c0_i32_1 = arith.constant 0 : i32
    return %c0_i32, %c0_i32_0 : i32, i32
  }
  func.func @transform_4(%arg0: i32) -> (i32, i32) {
    %c0_i32 = arith.constant 0 : i32
    %c0_i32_0 = arith.constant 0 : i32
    %c0_i32_1 = arith.constant 0 : i32
    return %c0_i32, %c0_i32_0 : i32, i32
  }
  func.func @transform_5(%arg0: i32) -> (i32, i32, i32) {
    %c0_i32 = arith.constant 0 : i32
    %c0_i32_0 = arith.constant 0 : i32
    %c0_i32_1 = arith.constant 0 : i32
    return %arg0, %c0_i32, %c0_i32_0 : i32, i32, i32
  }
}

</mosaic_0001>

<llo_original>
// kernel: fcn_head_pallas.1
$region0: #{fcn_head_pallas.1}
  #allocation0 [shape = 'u32[]', space=smem, size = 0x4, offset = 0x4, fixed_abs, tag = 'smem constant byte address 0x4 - core index']
  #allocation1 [shape = 'u32[144,128]{1,0:T(1,128)}', space=vmem, size = 0x12000, scoped, tag = 'internal scratch']
  %s0 = inlined_call_operand.vmem [shape: f32[2,288,256], index: 0, kind: input, shape index: {}]
  %s1 = inlined_call_operand.vmem [shape: f32[8,288], index: 1, kind: input, shape index: {}]
  %s2 = inlined_call_operand.vmem [shape: f32[8,1], index: 2, kind: input, shape index: {}]
  %s3 = inlined_call_operand.vmem [shape: f32[4,8], index: 3, kind: input, shape index: {}]
  %s4 = inlined_call_operand.vmem [shape: f32[4,1], index: 4, kind: input, shape index: {}]
  %s5 = inlined_call_operand.vmem [shape: f32[2,4,256], index: 5, kind: output, shape index: {}]
  %s6 = sld [smem:[#allocation0]]
  $region53: #{fcn_head_pallas.1} parent=0
    _
  %s8 = ssub.s32 1, %s6
  %s9 = scalar_select 0, %s8, %s6
  loop: start=0, step=1, limit=4
  $region2: #{fcn_head_pallas.1} parent=0 // loop_pre_header
    _
  $region3: #{fcn_head_pallas.1} parent=0 // loop_header
    %s11 = sphi 0, %s15
    %p12 = scmp.ge.s32.totalorder %s11, 4
    %s21 = sphi 0, %s23
    %s24 = sphi 0, %s21
    %s25 = sphi 0, %s24
    %s41 = sphi 0, %s25
    %s45 = sphi 0, %s45
    %s47 = sphi 0, %s45
    %s48 = sphi 0, %s47
    %s62 = sphi 0, %s48
    %s66 = sphi 0, %s66
    %s68 = sphi 0, %s66
    %s69 = sphi 0, %s68
    %s83 = sphi 0, %s69
    %s87 = sphi 0, %s87
    %s89 = sphi 0, %s87
    %s90 = sphi 0, %s89
    %s104 = sphi 0, %s90
    %s108 = sphi 0, %s108
    %s110 = sphi 0, %s108
    %s111 = sphi 0, %s110
    %s125 = sphi 0, %s111
    %s131 = sphi 0, %s133
    %s134 = sphi 0, %s131
    %s135 = sphi 0, %s134
    %s151 = sphi 0, %s135
  $region4: #{fcn_head_pallas.1} parent=0 // loop_header_branch
    %14 = sbr.rel (%p12) target = $region8
  $region5: #{fcn_head_pallas.1} parent=0 // loop_body
    %s16 = ssub.s32 %s11, 1
    %s17 = ssub.s32 %s11, 2
    %s18 = sadd.s32 %s11, 1
    %s19 = ssub.s32 %s11, %s18
    %p20 = scmp.eq.s32.totalorder %s19, 0
    %s22 = sadd.s32 %s21, 1
    %s23 = scalar_select %p20, %s21, %s22
    %p26 = pneg %p20
    %p27 = scmp.eq.s32.totalorder %s11, 1
    %p28 = por %p26, %p27
    %p29 = scmp.ne.s32.totalorder %s21, %s24
    %p30 = scmp.eq.s32.totalorder %s11, 0
    %p31 = por %p29, %p30
    %p32 = scmp.ne.s32.totalorder %s21, %s24
    %p33 = scmp.eq.s32.totalorder %s16, 1
    %p34 = por %p32, %p33
    %p35 = scmp.ne.s32.totalorder %s24, %s25
    %p36 = scmp.eq.s32.totalorder %s16, 0
    %p37 = por %p35, %p36
    %p38 = scmp.ne.s32.totalorder %s24, %s25
    %p39 = scmp.eq.s32.totalorder %s17, 1
    %p40 = por %p38, %p39
    %p42 = scmp.ne.s32.totalorder %s25, %s41
    %p43 = scmp.eq.s32.totalorder %s17, 0
    %p44 = por %p42, %p43
    %s46 = sadd.s32 %s45, 1
    %p49 = scmp.eq.s32.totalorder %s11, 1
    %p50 = scmp.ne.s32.totalorder %s45, %s47
    %p51 = scmp.eq.s32.totalorder %s11, 0
    %p52 = por %p50, %p51
    %p53 = scmp.ne.s32.totalorder %s45, %s47
    %p54 = scmp.eq.s32.totalorder %s16, 1
    %p55 = por %p53, %p54
    %p56 = scmp.ne.s32.totalorder %s47, %s48
    %p57 = scmp.eq.s32.totalorder %s16, 0
    %p58 = por %p56, %p57
    %p59 = scmp.ne.s32.totalorder %s47, %s48
    %p60 = scmp.eq.s32.totalorder %s17, 1
    %p61 = por %p59, %p60
    %p63 = scmp.ne.s32.totalorder %s48, %s62
    %p64 = scmp.eq.s32.totalorder %s17, 0
    %p65 = por %p63, %p64
    %s67 = sadd.s32 %s66, 1
    %p70 = scmp.eq.s32.totalorder %s11, 1
    %p71 = scmp.ne.s32.totalorder %s66, %s68
    %p72 = scmp.eq.s32.totalorder %s11, 0
    %p73 = por %p71, %p72
    %p74 = scmp.ne.s32.totalorder %s66, %s68
    %p75 = scmp.eq.s32.totalorder %s16, 1
    %p76 = por %p74, %p75
    %p77 = scmp.ne.s32.totalorder %s68, %s69
    %p78 = scmp.eq.s32.totalorder %s16, 0
    %p79 = por %p77, %p78
    %p80 = scmp.ne.s32.totalorder %s68, %s69
    %p81 = scmp.eq.s32.totalorder %s17, 1
    %p82 = por %p80, %p81
    %p84 = scmp.ne.s32.totalorder %s69, %s83
    %p85 = scmp.eq.s32.totalorder %s17, 0
    %p86 = por %p84, %p85
    %s88 = sadd.s32 %s87, 1
    %p91 = scmp.eq.s32.totalorder %s11, 1
    %p92 = scmp.ne.s32.totalorder %s87, %s89
    %p93 = scmp.eq.s32.totalorder %s11, 0
    %p94 = por %p92, %p93
    %p95 = scmp.ne.s32.totalorder %s87, %s89
    %p96 = scmp.eq.s32.totalorder %s16, 1
    %p97 = por %p95, %p96
    %p98 = scmp.ne.s32.totalorder %s89, %s90
    %p99 = scmp.eq.s32.totalorder %s16, 0
    %p100 = por %p98, %p99
    %p101 = scmp.ne.s32.totalorder %s89, %s90
    %p102 = scmp.eq.s32.totalorder %s17, 1
    %p103 = por %p101, %p102
    %p105 = scmp.ne.s32.totalorder %s90, %s104
    %p106 = scmp.eq.s32.totalorder %s17, 0
    %p107 = por %p105, %p106
    %s109 = sadd.s32 %s108, 1
    %p112 = scmp.eq.s32.totalorder %s11, 1
    %p113 = scmp.ne.s32.totalorder %s108, %s110
    %p114 = scmp.eq.s32.totalorder %s11, 0
    %p115 = por %p113, %p114
    %p116 = scmp.ne.s32.totalorder %s108, %s110
    %p117 = scmp.eq.s32.totalorder %s16, 1
    %p118 = por %p116, %p117
    %p119 = scmp.ne.s32.totalorder %s110, %s111
    %p120 = scmp.eq.s32.totalorder %s16, 0
    %p121 = por %p119, %p120
    %p122 = scmp.ne.s32.totalorder %s110, %s111
    %p123 = scmp.eq.s32.totalorder %s17, 1
    %p124 = por %p122, %p123
    %p126 = scmp.ne.s32.totalorder %s111, %s125
    %p127 = scmp.eq.s32.totalorder %s17, 0
    %p128 = por %p126, %p127
    %s129 = ssub.s32 %s11, %s18
    %p130 = scmp.eq.s32.totalorder %s129, 0
    %s132 = sadd.s32 %s131, 1
    %s133 = scalar_select %p130, %s131, %s132
    %p136 = pneg %p130
    %p137 = scmp.eq.s32.totalorder %s11, 1
    %p138 = por %p136, %p137
    %p139 = scmp.ne.s32.totalorder %s131, %s134
    %p140 = scmp.eq.s32.totalorder %s11, 0
    %p141 = por %p139, %p140
    %p142 = scmp.ne.s32.totalorder %s131, %s134
    %p143 = scmp.eq.s32.totalorder %s16, 1
    %p144 = por %p142, %p143
    %p145 = scmp.ne.s32.totalorder %s134, %s135
    %p146 = scmp.eq.s32.totalorder %s16, 0
    %p147 = por %p145, %p146
    %p148 = scmp.ne.s32.totalorder %s134, %s135
    %p149 = scmp.eq.s32.totalorder %s17, 1
    %p150 = por %p148, %p149
    %p152 = scmp.ne.s32.totalorder %s135, %s151
    %p153 = scmp.eq.s32.totalorder %s17, 0
    %p154 = por %p152, %p153
    %p155 = scmp.le.s32.totalorder 1, %s11
    %p156 = scmp.lt.s32.totalorder %s11, 3
    %p157 = pnand %p155, %p156
    %p158 = pneg %p157
    // Predicated region
    $region9: #{fcn_head_pallas.1} parent=5 // pred_check
      _
    $region10: #{fcn_head_pallas.1} parent=5 // pred_check_branch
      %160 = sbr.rel (%p157) target = $region12
    $region11: #{fcn_head_pallas.1} parent=5 // pred_region
      %s161 = ssub.s32 %s11, 1
      // Predicated region
      $region13: #{fcn_head_pallas.1} parent=11 // pred_check
        %p162 = pneg %p58
      $region14: #{fcn_head_pallas.1} parent=11 // pred_check_branch
        %164 = sbr.rel (%p162) target = $region16
      $region15: #{fcn_head_pallas.1} parent=11 // pred_region
        _
      $region16: #{fcn_head_pallas.1} parent=11 // pred_fallthru
        _
      // Predicated region
      $region17: #{fcn_head_pallas.1} parent=11 // pred_check
        %p165 = pneg %p79
      $region18: #{fcn_head_pallas.1} parent=11 // pred_check_branch
        %167 = sbr.rel (%p165) target = $region20
      $region19: #{fcn_head_pallas.1} parent=11 // pred_region
        _
      $region20: #{fcn_head_pallas.1} parent=11 // pred_fallthru
        _
      // Predicated region
      $region21: #{fcn_head_pallas.1} parent=11 // pred_check
        %p168 = pneg %p100
      $region22: #{fcn_head_pallas.1} parent=11 // pred_check_branch
        %170 = sbr.rel (%p168) target = $region24
      $region23: #{fcn_head_pallas.1} parent=11 // pred_region
        _
      $region24: #{fcn_head_pallas.1} parent=11 // pred_fallthru
        _
      // Predicated region
      $region25: #{fcn_head_pallas.1} parent=11 // pred_check
        %p171 = pneg %p121
      $region26: #{fcn_head_pallas.1} parent=11 // pred_check_branch
        %173 = sbr.rel (%p171) target = $region28
      $region27: #{fcn_head_pallas.1} parent=11 // pred_region
        _
      $region28: #{fcn_head_pallas.1} parent=11 // pred_fallthru
        _
    $region12: #{fcn_head_pallas.1} parent=5 // pred_fallthru
      _
    %p174 = scmp.lt.s32.totalorder %s11, 2
    // Predicated region
    $region29: #{fcn_head_pallas.1} parent=5 // pred_check
      %p175 = pneg %p174
    $region30: #{fcn_head_pallas.1} parent=5 // pred_check_branch
      %177 = sbr.rel (%p175) target = $region32
    $region31: #{fcn_head_pallas.1} parent=5 // pred_region
      // Predicated region
      $region33: #{fcn_head_pallas.1} parent=31 // pred_check
        %p178 = pneg %p31
      $region34: #{fcn_head_pallas.1} parent=31 // pred_check_branch
        %180 = sbr.rel (%p178) target = $region36
      $region35: #{fcn_head_pallas.1} parent=31 // pred_region
        %p181 = scmp.lt.s32.totalorder %s11, 1
        %s182 = scalar_select %p181, %s11, 1
        %s183 = smul.addr %s182, 72
        %s184 = smul.addr %s183, 8
        %s185 = scalar_lea.vmem %s0, %s184
      $region36: #{fcn_head_pallas.1} parent=31 // pred_fallthru
        _
    $region32: #{fcn_head_pallas.1} parent=5 // pred_fallthru
      _
    %p186 = scmp.le.s32.totalorder 1, %s11
    %p187 = scmp.lt.s32.totalorder %s11, 3
    %p188 = pnand %p186, %p187
    %p189 = pneg %p188
    // Predicated region
    $region37: #{fcn_head_pallas.1} parent=5 // pred_check
      _
    $region38: #{fcn_head_pallas.1} parent=5 // pred_check_branch
      %191 = sbr.rel (%p188) target = $region40
    $region39: #{fcn_head_pallas.1} parent=5 // pred_region
      %s192 = ssub.s32 %s11, 1
      %p193 = scmp.lt.s32.totalorder %s16, 1
      %s194 = scalar_select %p193, %s16, 1
      %s195 = smul.addr %s194, 72
      %s196 = smul.addr %s195, 8
      %s197 = scalar_lea.vmem %s0, %s196
      %p198 = pneg %p37
      %p199 = pneg %p34
      %p200 = pneg %p58
      %p201 = pneg %p55
      %p202 = pneg %p79
      %p203 = pneg %p76
      %p204 = pneg %p100
      %p205 = pneg %p97
      %p206 = pneg %p121
      %p207 = pneg %p118
      %p208 = pneg %p147
      %p209 = pneg %p144
      %p210 = scmp.lt.s32.totalorder %s16, 1
      %s211 = scalar_select %p210, %s16, 1
      %s212 = smul.addr %s211, 2
      %s213 = smul.addr %s212, 4
      %s214 = scalar_lea.vmem %s5, %s213
      %p215 = scmp.lt.s32.totalorder %s16, 1
      %s216 = scalar_select %p215, %s16, 1
      %s217 = smul.addr %s216, 72
      %s218 = smul.addr %s217, 8
      %s219 = scalar_lea.vmem %s0, %s218
      %p220 = scmp.lt.s32.totalorder %s16, 1
      %s221 = scalar_select %p220, %s16, 1
      %s222 = smul.addr %s221, 2
      %s223 = smul.addr %s222, 4
      %s224 = scalar_lea.vmem %s5, %s223
      %v225 = vld [vmem:[%s219] sm:$0xff]
      %v226 = vld [vmem:[%s219 + $0x8] sm:$0xff]
      %v227 = vld [vmem:[%s219 + $0x10] sm:$0xff]
      %v228 = vld [vmem:[%s219 + $0x18] sm:$0xff]
      %v229 = vld [vmem:[%s219 + $0x20] sm:$0xff]
      %v230 = vld [vmem:[%s219 + $0x28] sm:$0xff]
      %v231 = vld [vmem:[%s219 + $0x30] sm:$0xff]
      %v232 = vld [vmem:[%s219 + $0x38] sm:$0xff]
      %v233 = vld [vmem:[%s219 + $0x40] sm:$0xff]
      %v234 = vld [vmem:[%s219 + $0x48] sm:$0xff]
      %v235 = vld [vmem:[%s219 + $0x50] sm:$0xff]
      %v236 = vld [vmem:[%s219 + $0x58] sm:$0xff]
      %v237 = vld [vmem:[%s219 + $0x60] sm:$0xff]
      %v238 = vld [vmem:[%s219 + $0x68] sm:$0xff]
      %v239 = vld [vmem:[%s219 + $0x70] sm:$0xff]
      %v240 = vld [vmem:[%s219 + $0x78] sm:$0xff]
      %v241 = vld [vmem:[%s219 + $0x80] sm:$0xff]
      %v242 = vld [vmem:[%s219 + $0x88] sm:$0xff]
      %v243 = vld [vmem:[%s219 + $0x90] sm:$0xff]
      %v244 = vld [vmem:[%s219 + $0x98] sm:$0xff]
      %v245 = vld [vmem:[%s219 + $0xa0] sm:$0xff]
      %v246 = vld [vmem:[%s219 + $0xa8] sm:$0xff]
      %v247 = vld [vmem:[%s219 + $0xb0] sm:$0xff]
      %v248 = vld [vmem:[%s219 + $0xb8] sm:$0xff]
      %v249 = vld [vmem:[%s219 + $0xc0] sm:$0xff]
      %v250 = vld [vmem:[%s219 + $0xc8] sm:$0xff]
      %v251 = vld [vmem:[%s219 + $0xd0] sm:$0xff]
      %v252 = vld [vmem:[%s219 + $0xd8] sm:$0xff]
      %v253 = vld [vmem:[%s219 + $0xe0] sm:$0xff]
      %v254 = vld [vmem:[%s219 + $0xe8] sm:$0xff]
      %v255 = vld [vmem:[%s219 + $0xf0] sm:$0xff]
      %v256 = vld [vmem:[%s219 + $0xf8] sm:$0xff]
      %v257 = vld [vmem:[%s219 + $0x100] sm:$0xff]
      %v258 = vld [vmem:[%s219 + $0x108] sm:$0xff]
      %v259 = vld [vmem:[%s219 + $0x110] sm:$0xff]
      %v260 = vld [vmem:[%s219 + $0x118] sm:$0xff]
      %v261 = vld [vmem:[%s219 + $0x120] sm:$0xff]
      %v262 = vld [vmem:[%s219 + $0x128] sm:$0xff]
      %v263 = vld [vmem:[%s219 + $0x130] sm:$0xff]
      %v264 = vld [vmem:[%s219 + $0x138] sm:$0xff]
      %v265 = vld [vmem:[%s219 + $0x140] sm:$0xff]
      %v266 = vld [vmem:[%s219 + $0x148] sm:$0xff]
      %v267 = vld [vmem:[%s219 + $0x150] sm:$0xff]
      %v268 = vld [vmem:[%s219 + $0x158] sm:$0xff]
      %v269 = vld [vmem:[%s219 + $0x160] sm:$0xff]
      %v270 = vld [vmem:[%s219 + $0x168] sm:$0xff]
      %v271 = vld [vmem:[%s219 + $0x170] sm:$0xff]
      %v272 = vld [vmem:[%s219 + $0x178] sm:$0xff]
      %v273 = vld [vmem:[%s219 + $0x180] sm:$0xff]
      %v274 = vld [vmem:[%s219 + $0x188] sm:$0xff]
      %v275 = vld [vmem:[%s219 + $0x190] sm:$0xff]
      %v276 = vld [vmem:[%s219 + $0x198] sm:$0xff]
      %v277 = vld [vmem:[%s219 + $0x1a0] sm:$0xff]
      %v278 = vld [vmem:[%s219 + $0x1a8] sm:$0xff]
      %v279 = vld [vmem:[%s219 + $0x1b0] sm:$0xff]
      %v280 = vld [vmem:[%s219 + $0x1b8] sm:$0xff]
      %v281 = vld [vmem:[%s219 + $0x1c0] sm:$0xff]
      %v282 = vld [vmem:[%s219 + $0x1c8] sm:$0xff]
      %v283 = vld [vmem:[%s219 + $0x1d0] sm:$0xff]
      %v284 = vld [vmem:[%s219 + $0x1d8] sm:$0xff]
      %v285 = vld [vmem:[%s219 + $0x1e0] sm:$0xff]
      %v286 = vld [vmem:[%s219 + $0x1e8] sm:$0xff]
      %v287 = vld [vmem:[%s219 + $0x1f0] sm:$0xff]
      %v288 = vld [vmem:[%s219 + $0x1f8] sm:$0xff]
      %v289 = vld [vmem:[%s219 + $0x200] sm:$0xff]
      %v290 = vld [vmem:[%s219 + $0x208] sm:$0xff]
      %v291 = vld [vmem:[%s219 + $0x210] sm:$0xff]
      %v292 = vld [vmem:[%s219 + $0x218] sm:$0xff]
      %v293 = vld [vmem:[%s219 + $0x220] sm:$0xff]
      %v294 = vld [vmem:[%s219 + $0x228] sm:$0xff]
      %v295 = vld [vmem:[%s219 + $0x230] sm:$0xff]
      %v296 = vld [vmem:[%s219 + $0x238] sm:$0xff]
      %v297 = vld [vmem:[%s1] sm:$0xff]
      %v298 = vld [vmem:[%s1 + $0x8] sm:$0xff]
      %v299 = vld [vmem:[%s1 + $0x10] sm:$0xff]
      %v300 = vld [vmem:[%s2] sm:$0xff]
      %302 = vset.pattern.permute.xlu0 0
      %303 = vperm.xlu0 %302, %v300
      %v304 = vpop.permute.xlu0 %303
      %vm306 = vcmask 261120
      %v308 = vsel %vm306, %v299, 0
      %310 = vmatprep.subr.mxu0 %v226
      %311 = vmatpush1.msra.mxu0 %v225
      %312 = vmatprep.subr.mxu0 %v228
      %313 = vmatpush1.msra.mxu0 %v227
      %314 = vmatprep.subr.mxu0 %v230
      %315 = vmatpush1.msra.mxu0 %v229
      %316 = vmatprep.subr.mxu0 %v232
      %317 = vmatpush1.msra.mxu0 %v231
      %318 = vmatprep.subr.mxu0 %v234
      %319 = vmatpush1.msra.mxu0 %v233
      %320 = vmatprep.subr.mxu0 %v236
      %321 = vmatpush1.msra.mxu0 %v235
      %322 = vmatprep.subr.mxu0 %v238
      %323 = vmatpush1.msra.mxu0 %v237
      %324 = vmatprep.subr.mxu0 %v240
      %325 = vmatpush1.msra.mxu0 %v239
      %326 = vmatprep.subr.mxu0 %v242
      %327 = vmatpush1.msra.mxu0 %v241
      %328 = vmatprep.subr.mxu0 %v244
      %329 = vmatpush1.msra.mxu0 %v243
      %330 = vmatprep.subr.mxu0 %v246
      %331 = vmatpush1.msra.mxu0 %v245
      %332 = vmatprep.subr.mxu0 %v248
      %333 = vmatpush1.msra.mxu0 %v247
      %334 = vmatprep.subr.mxu0 %v250
      %335 = vmatpush1.msra.mxu0 %v249
      %336 = vmatprep.subr.mxu0 %v252
      %337 = vmatpush1.msra.mxu0 %v251
      %338 = vmatprep.subr.mxu0 %v254
      %339 = vmatpush1.msra.mxu0 %v253
      %340 = vmatprep.subr.mxu0 %v256
      %341 = vmatpush1.msra.mxu0 %v255
      %342 = vmatprep.subr.mxu0 %v258
      %343 = vmatpush1.msra.mxu0 %v257
      %344 = vmatprep.subr.mxu0 %v260
      %345 = vmatpush1.msra.mxu0 %v259
      %346 = vmatprep.subr.mxu0 %v262
      %347 = vmatpush1.msra.mxu0 %v261
      %348 = vmatprep.subr.mxu0 %v264
      %349 = vmatpush1.msra.mxu0 %v263
      %350 = vmatprep.subr.mxu0 %v266
      %351 = vmatpush1.msra.mxu0 %v265
      %352 = vmatprep.subr.mxu0 %v268
      %353 = vmatpush1.msra.mxu0 %v267
      %354 = vmatprep.subr.mxu0 %v270
      %355 = vmatpush1.msra.mxu0 %v269
      %356 = vmatprep.subr.mxu0 %v272
      %357 = vmatpush1.msra.mxu0 %v271
      %358 = vmatprep.subr.mxu0 %v274
      %359 = vmatpush1.msra.mxu0 %v273
      %360 = vmatprep.subr.mxu0 %v276
      %361 = vmatpush1.msra.mxu0 %v275
      %362 = vmatprep.subr.mxu0 %v278
      %363 = vmatpush1.msra.mxu0 %v277
      %364 = vmatprep.subr.mxu0 %v280
      %365 = vmatpush1.msra.mxu0 %v279
      %366 = vmatprep.subr.mxu0 %v282
      %367 = vmatpush1.msra.mxu0 %v281
      %368 = vmatprep.subr.mxu0 %v284
      %369 = vmatpush1.msra.mxu0 %v283
      %370 = vmatprep.subr.mxu0 %v286
      %371 = vmatpush1.msra.mxu0 %v285
      %372 = vmatprep.subr.mxu0 %v288
      %373 = vmatpush1.msra.mxu0 %v287
      %374 = vmatprep.mubr.f32.mxu0 %v298
      %375 = vmatmul.mubr.f32.gmra.mrb[0].mxu0 %v297
      %v376 = vpop.f32.mrb[0].mxu0
      %v377 = vadd.f32 %v304, %v376
      %v378 = vpop.f32.mrb[0].mxu0
      %v379 = vadd.f32 %v304, %v378
      %380 = vdwg.mxu0
      %381 = vmatprep.subr.mxu0 %v290
      %382 = vmatpush1.msra.mxu0 %v289
      %383 = vmatprep.subr.mxu0 %v292
      %384 = vmatpush1.msra.mxu0 %v291
      %385 = vmatprep.subr.mxu0 %v294
      %386 = vmatpush1.msra.mxu0 %v293
      %387 = vmatprep.subr.mxu0 %v296
      %388 = vmatpush1.msra.mxu0 %v295
      %389 = vmatprep.subr.mxu0 0.0
      %390 = vmatpush1.msra.mxu0 0.0
      %391 = vmatprep.subr.mxu0 0.0
      %392 = vmatpush1.msra.mxu0 0.0
      %393 = vmatprep.subr.mxu0 0.0
      %394 = vmatpush1.msra.mxu0 0.0
      %395 = vmatprep.subr.mxu0 0.0
      %396 = vmatpush1.msra.mxu0 0.0
      %397 = vmatprep.subr.mxu0 0.0
      %398 = vmatpush1.msra.mxu0 0.0
      %399 = vmatprep.subr.mxu0 0.0
      %400 = vmatpush1.msra.mxu0 0.0
      %401 = vmatprep.subr.mxu0 0.0
      %402 = vmatpush1.msra.mxu0 0.0
      %403 = vmatprep.subr.mxu0 0.0
      %404 = vmatpush1.msra.mxu0 0.0
      %405 = vmatprep.subr.mxu0 0.0
      %406 = vmatpush1.msra.mxu0 0.0
      %407 = vmatprep.subr.mxu0 0.0
      %408 = vmatpush1.msra.mxu0 0.0
      %409 = vmatprep.subr.mxu0 0.0
      %410 = vmatpush1.msra.mxu0 0.0
      %411 = vmatprep.subr.mxu0 0.0
      %412 = vmatpush1.msra.mxu0 0.0
      %413 = vmatprep.subr.mxu0 0.0
      %414 = vmatpush1.msra.mxu0 0.0
      %415 = vmatprep.subr.mxu0 0.0
      %416 = vmatpush1.msra.mxu0 0.0
      %417 = vmatprep.subr.mxu0 0.0
      %418 = vmatpush1.msra.mxu0 0.0
      %419 = vmatprep.subr.mxu0 0.0
      %420 = vmatpush1.msra.mxu0 0.0
      %421 = vmatprep.subr.mxu0 0.0
      %422 = vmatpush1.msra.mxu0 0.0
      %423 = vmatprep.subr.mxu0 0.0
      %424 = vmatpush1.msra.mxu0 0.0
      %425 = vmatprep.subr.mxu0 0.0
      %426 = vmatpush1.msra.mxu0 0.0
      %427 = vmatprep.subr.mxu0 0.0
      %428 = vmatpush1.msra.mxu0 0.0
      %429 = vmatprep.subr.mxu0 0.0
      %430 = vmatpush1.msra.mxu0 0.0
      %431 = vmatprep.subr.mxu0 0.0
      %432 = vmatpush1.msra.mxu0 0.0
      %433 = vmatprep.subr.mxu0 0.0
      %434 = vmatpush1.msra.mxu0 0.0
      %435 = vmatprep.subr.mxu0 0.0
      %436 = vmatpush1.msra.mxu0 0.0
      %437 = vmatprep.subr.mxu0 0.0
      %438 = vmatpush1.msra.mxu0 0.0
      %439 = vmatprep.subr.mxu0 0.0
      %440 = vmatpush1.msra.mxu0 0.0
      %441 = vmatprep.subr.mxu0 0.0
      %442 = vmatpush1.msra.mxu0 0.0
      %443 = vmatprep.subr.mxu0 0.0
      %444 = vmatpush1.msra.mxu0 0.0
      %445 = vmatprep.mubr.f32.mxu0 0.0
      %446 = vmatmul.mubr.f32.gmra.mrb[0].mxu0 %v308
      %v447 = vpop.f32.mrb[0].mxu0
      %v448 = vadd.f32 %v377, %v447
      %v449 = vpop.f32.mrb[0].mxu0
      %v450 = vadd.f32 %v379, %v449
      %451 = vdwg.mxu0
      %v452 = vmax.f32 %v448, 0.0
      %v453 = vmax.f32 %v450, 0.0
      %v454 = vld [vmem:[%s3] sm:$0xf]
      %v455 = vld [vmem:[%s4] sm:$0xf]
      %457 = vset.pattern.permute.xlu0 0
      %458 = vperm.xlu0 %457, %v455
      %v459 = vpop.permute.xlu0 %458
      %vm461 = vcmask 64512
      %v463 = vsel %vm461, %v454, 0
      %465 = vmatprep.subr.mxu0 %v453
      %466 = vmatpush1.msra.mxu0 %v452
      %467 = vmatprep.subr.mxu0 0.0
      %468 = vmatpush1.msra.mxu0 0.0
      %469 = vmatprep.subr.mxu0 0.0
      %470 = vmatpush1.msra.mxu0 0.0
      %471 = vmatprep.subr.mxu0 0.0
      %472 = vmatpush1.msra.mxu0 0.0
      %473 = vmatprep.subr.mxu0 0.0
      %474 = vmatpush1.msra.mxu0 0.0
      %475 = vmatprep.subr.mxu0 0.0
      %476 = vmatpush1.msra.mxu0 0.0
      %477 = vmatprep.subr.mxu0 0.0
      %478 = vmatpush1.msra.mxu0 0.0
      %479 = vmatprep.subr.mxu0 0.0
      %480 = vmatpush1.msra.mxu0 0.0
      %481 = vmatprep.subr.mxu0 0.0
      %482 = vmatpush1.msra.mxu0 0.0
      %483 = vmatprep.subr.mxu0 0.0
      %484 = vmatpush1.msra.mxu0 0.0
      %485 = vmatprep.subr.mxu0 0.0
      %486 = vmatpush1.msra.mxu0 0.0
      %487 = vmatprep.subr.mxu0 0.0
      %488 = vmatpush1.msra.mxu0 0.0
      %489 = vmatprep.subr.mxu0 0.0
      %490 = vmatpush1.msra.mxu0 0.0
      %491 = vmatprep.subr.mxu0 0.0
      %492 = vmatpush1.msra.mxu0 0.0
      %493 = vmatprep.subr.mxu0 0.0
      %494 = vmatpush1.msra.mxu0 0.0
      %495 = vmatprep.subr.mxu0 0.0
      %496 = vmatpush1.msra.mxu0 0.0
      %497 = vmatprep.subr.mxu0 0.0
      %498 = vmatpush1.msra.mxu0 0.0
      %499 = vmatprep.subr.mxu0 0.0
      %500 = vmatpush1.msra.mxu0 0.0
      %501 = vmatprep.subr.mxu0 0.0
      %502 = vmatpush1.msra.mxu0 0.0
      %503 = vmatprep.subr.mxu0 0.0
      %504 = vmatpush1.msra.mxu0 0.0
      %505 = vmatprep.subr.mxu0 0.0
      %506 = vmatpush1.msra.mxu0 0.0
      %507 = vmatprep.subr.mxu0 0.0
      %508 = vmatpush1.msra.mxu0 0.0
      %509 = vmatprep.subr.mxu0 0.0
      %510 = vmatpush1.msra.mxu0 0.0
      %511 = vmatprep.subr.mxu0 0.0
      %512 = vmatpush1.msra.mxu0 0.0
      %513 = vmatprep.subr.mxu0 0.0
      %514 = vmatpush1.msra.mxu0 0.0
      %515 = vmatprep.subr.mxu0 0.0
      %516 = vmatpush1.msra.mxu0 0.0
      %517 = vmatprep.subr.mxu0 0.0
      %518 = vmatpush1.msra.mxu0 0.0
      %519 = vmatprep.subr.mxu0 0.0
      %520 = vmatpush1.msra.mxu0 0.0
      %521 = vmatprep.subr.mxu0 0.0
      %522 = vmatpush1.msra.mxu0 0.0
      %523 = vmatprep.subr.mxu0 0.0
      %524 = vmatpush1.msra.mxu0 0.0
      %525 = vmatprep.subr.mxu0 0.0
      %526 = vmatpush1.msra.mxu0 0.0
      %527 = vmatprep.subr.mxu0 0.0
      %528 = vmatpush1.msra.mxu0 0.0
      %529 = vmatprep.mubr.f32.mxu0 0.0
      %530 = vmatmul.mubr.f32.gmra.mrb[0].mxu0 %v463
      %v531 = vpop.f32.mrb[0].mxu0
      %v532 = vadd.f32 %v459, %v531
      %v533 = vpop.f32.mrb[0].mxu0
      %v534 = vadd.f32 %v459, %v533
      %535 = vdwg.mxu0
      %v536 = vxor.u32 %v532, 2147483648
      %v537 = vxor.u32 %v534, 2147483648
      %v538 = vmul.f32 %v536, 1.442695
      %v539 = vpow.pop %v538
      %v540 = vmul.f32 %v537, 1.442695
      %v541 = vpow.pop %v540
      %v542 = vadd.f32 %v539, 1.0
      %v543 = vadd.f32 %v541, 1.0
      %v544 = vrcp.pop %v542
      %v545 = vmul.f32 1.0, %v544
      %v546 = vrcp.pop %v543
      %v547 = vmul.f32 1.0, %v546
      %v550 = vcombine.low %v545, %v547
      %552 = vst [vmem:[%s224] sm:$0xff] %v550
      %p553 = scmp.lt.s32.totalorder %s16, 1
      %s554 = scalar_select %p553, %s16, 1
      %s555 = smul.addr %s554, 2
      %s556 = smul.addr %s555, 4
      %s557 = scalar_lea.vmem %s5, %s556
      // Predicated region
      $region41: #{fcn_head_pallas.1} parent=39 // pred_check
        %p558 = pneg %p144
      $region42: #{fcn_head_pallas.1} parent=39 // pred_check_branch
        %560 = sbr.rel (%p558) target = $region44
      $region43: #{fcn_head_pallas.1} parent=39 // pred_region
        _
      $region44: #{fcn_head_pallas.1} parent=39 // pred_fallthru
        _
    $region40: #{fcn_head_pallas.1} parent=5 // pred_fallthru
      _
    %p561 = scmp.le.s32.totalorder 2, %s11
    // Predicated region
    $region45: #{fcn_head_pallas.1} parent=5 // pred_check
      %p562 = pneg %p561
    $region46: #{fcn_head_pallas.1} parent=5 // pred_check_branch
      %564 = sbr.rel (%p562) target = $region48
    $region47: #{fcn_head_pallas.1} parent=5 // pred_region
      %s565 = ssub.s32 %s11, 2
      // Predicated region
      $region49: #{fcn_head_pallas.1} parent=47 // pred_check
        %p566 = pneg %p150
      $region50: #{fcn_head_pallas.1} parent=47 // pred_check_branch
        %568 = sbr.rel (%p566) target = $region52
      $region51: #{fcn_head_pallas.1} parent=47 // pred_region
        %p569 = scmp.lt.s32.totalorder %s17, 1
        %s570 = scalar_select %p569, %s17, 1
        %s571 = smul.addr %s570, 2
        %s572 = smul.addr %s571, 4
        %s573 = scalar_lea.vmem %s5, %s572
      $region52: #{fcn_head_pallas.1} parent=47 // pred_fallthru
        _
    $region48: #{fcn_head_pallas.1} parent=5 // pred_fallthru
      _
  $region6: #{fcn_head_pallas.1} parent=0 // loop_footer
    %s15 = sadd.s32 1, %s11
  $region7: #{fcn_head_pallas.1} parent=0 // loop_footer_branch
    %10 = sbr.rel target = $region3
  $region8: #{fcn_head_pallas.1} parent=0 // loop_exit
    _

</llo_original>
